<compile_context>
chip_gen: v7x
topology: tpu7x:2x2x1
jax: 0.10.0
libtpu: 0.0.40
codegen_flags: <defaults>
</compile_context>

<pallas_src>
import functools

import jax
import jax.numpy as jnp
from jax.experimental import pallas as pl
from jax.experimental.pallas import tpu as pltpu


def _dice_partial_kernel(logits_ref, tgt_ref, out_ref, acc_ref, *,
                         apply_softmax: bool, hw: int, tile_hw: int,
                         need_mask: bool):
    t = pl.program_id(1)

    @pl.when(t == 0)
    def _():
        acc_ref[...] = jnp.zeros_like(acc_ref)

    x = logits_ref[...].astype(jnp.float32)       # (C, T)  classes on sublanes
    tgt = tgt_ref[...]                            # (1, T)  int32 class ids

    # one-hot selection mask: class-id iota on the sublane axis vs targets
    cls = jax.lax.broadcasted_iota(jnp.int32, x.shape, 0)   # (C, T)
    sel = cls == tgt                                         # (C, T)

    if apply_softmax:
        m = jnp.max(x, axis=0, keepdims=True)                # (1, T)
        e = jnp.exp(x - m)                                   # (C, T)
        num = jnp.sum(jnp.where(sel, e, 0.0), axis=0, keepdims=True)  # (1, T)
        den = jnp.sum(e, axis=0, keepdims=True)                        # (1, T)
        # approx=True would be ~1e-4 relative; keep exact to hold 1e-5 tol.
        contrib = num * pl.reciprocal(den, approx=False)
    else:
        contrib = jnp.sum(jnp.where(sel, x, 0.0), axis=0, keepdims=True)

    if need_mask:
        # Ragged last tile: zero out lanes past the true pixel count.
        lane = jax.lax.broadcasted_iota(jnp.int32, contrib.shape, 1)
        limit = hw - t * tile_hw
        contrib = jnp.where(lane < limit, contrib, 0.0)

    acc_ref[...] += contrib                        # pure VPU add per step

    @pl.when(t == pl.num_programs(1) - 1)
    def _():
        out_ref[...] = acc_ref[...]                # lane-dense (1, T) store


def multiclass_dice_loss(logits_nchw, targets_nhw, num_classes,
                         softmax_dim=None, smooth=1e-06, max_tile_hw=8192):
    """Pallas implementation of MulticlassDiceLoss.forward.

    logits_nchw: (N, C, H, W) float (f32 or bf16; cast to f32 in-kernel)
    targets_nhw: (N, H, W) int class ids in [0, num_classes)
    softmax_dim: None -> raw logits; 1 -> softmax over the channel axis
                 (matches nn.Softmax(dim=1) on NCHW).
    Returns a scalar float32 loss.
    """
    N, C, H, W = logits_nchw.shape
    assert C == num_classes
    assert targets_nhw.shape == (N, H, W)
    if softmax_dim is not None and softmax_dim not in (1, -3):
        # TODO(synk): softmax over a non-channel NCHW dim is not supported by
        # this (C, H*W) tiled layout.
        raise NotImplementedError("only softmax_dim in (None, 1) supported")

    HW = H * W
    # Free reshapes of NCHW / NHW -- no transpose, no pad, no extra HBM copy.
    logits = logits_nchw.reshape(N, C, HW)
    tgt = targets_nhw.reshape(N, 1, HW).astype(jnp.int32)

    if HW <= max_tile_hw:
        tile_hw = HW                       # single tile: full-dim block is legal
    else:
        tile_hw = max_tile_hw              # multiple of 128 by construction
    num_tiles = pl.cdiv(HW, tile_hw)
    need_mask = (num_tiles * tile_hw != HW)

    kernel = functools.partial(
        _dice_partial_kernel,
        apply_softmax=(softmax_dim is not None),
        hw=HW, tile_hw=tile_hw, need_mask=need_mask,
    )

    partials = pl.pallas_call(
        kernel,
        out_shape=jax.ShapeDtypeStruct((N, 1, tile_hw), jnp.float32),
        grid_spec=pltpu.PrefetchScalarGridSpec(
            num_scalar_prefetch=0,
            grid=(N, num_tiles),
            in_specs=[
                pl.BlockSpec((None, C, tile_hw), lambda n, t: (n, 0, t)),
                pl.BlockSpec((None, 1, tile_hw), lambda n, t: (n, 0, t)),
            ],
            out_specs=pl.BlockSpec((None, 1, tile_hw), lambda n, t: (n, 0, 0)),
            scratch_shapes=[pltpu.VMEM((1, tile_hw), jnp.float32)],
        ),
        compiler_params=pltpu.CompilerParams(
            dimension_semantics=("parallel", "arbitrary"),
        ),
    )(logits, tgt)

    # Tiny finalization in plain JAX (N * tile_hw floats).
    intersection = jnp.sum(partials)
    numel = jnp.float32(N * H * W)                 # targets.numel()
    dice = 2.0 * intersection / (intersection + numel + jnp.float32(smooth))
    return -jnp.log(dice)


def _reference(logits, targets, num_classes, softmax_dim, smooth=1e-06):
    """Pure-JAX reference mirroring the PyTorch module exactly."""
    probs = logits
    if softmax_dim is not None:
        probs = jax.nn.softmax(logits, axis=softmax_dim)
    oh = jax.nn.one_hot(targets, num_classes, dtype=probs.dtype)  # (N,H,W,C)
    oh = jnp.transpose(oh, (0, 3, 1, 2))                          # (N,C,H,W)
    inter = jnp.sum(oh * probs)
    mod_b = targets.size
    dice = 2.0 * inter / (inter + mod_b + smooth)
    return -jnp.log(dice)


if __name__ == "__main__":
    key = jax.random.PRNGKey(0)
    k1, k2 = jax.random.split(key)

    N, C, H, W = 2, 4, 16, 16
    num_classes = C
    softmax_dim = 1  # softmax over channel axis (typical U-Net usage)

    logits = jax.random.normal(k1, (N, C, H, W), dtype=jnp.float32)
    targets = jax.random.randint(k2, (N, H, W), 0, num_classes, dtype=jnp.int32)

    loss = multiclass_dice_loss(logits, targets, num_classes,
                                softmax_dim=softmax_dim)
    loss = jax.block_until_ready(loss)

    ref = _reference(logits, targets, num_classes, softmax_dim)
    assert jnp.allclose(loss, ref, rtol=1e-5, atol=1e-5), (loss, ref)

    print("KERNEL_OK")
</pallas_src>

<mosaic_0001>
module attributes {stable_mosaic.version = 11 : i64} {
  func.func @_dice_partial_kernel(%arg0: i32, %arg1: i32, %arg2: memref<1x4x256xf32, #tpu.memory_space<vmem>>, %arg3: memref<1x1x256xi32, #tpu.memory_space<vmem>>, %arg4: memref<1x1x256xf32, #tpu.memory_space<vmem>>, %arg5: memref<1x256xf32, #tpu.memory_space<vmem>>) attributes {dimension_semantics = [#tpu.dimension_semantics<parallel>, #tpu.dimension_semantics<arbitrary>], iteration_bounds = array<i64: 2, 1>, scalar_prefetch = 0 : i64, scratch_operands = 1 : i64, tpu.core_type = #tpu.core_type<tc>, window_params = [{transform_indices = @transform_0, window_bounds = array<i64: 1, 4, 256>}, {transform_indices = @transform_1, window_bounds = array<i64: 1, 1, 256>}, {transform_indices = @transform_2, window_bounds = array<i64: 1, 1, 256>}]} {
    %c0_i32 = arith.constant 0 : i32
    %0 = arith.cmpi eq, %arg1, %c0_i32 : i32
    %1 = arith.extui %0 : i1 to i32
    %c0_i32_0 = arith.constant 0 : i32
    %2 = arith.cmpi ne, %1, %c0_i32_0 : i32
    scf.if %2 {
      %cst_15 = arith.constant 0.000000e+00 : f32
      %29 = vector.broadcast %cst_15 : f32 to vector<1x256xf32>
      %c0_16 = arith.constant 0 : index
      %c0_17 = arith.constant 0 : index
      %30 = vector.load %arg5[%c0_16, %c0_17] : memref<1x256xf32, #tpu.memory_space<vmem>>, vector<1x256xf32>
      tpu.vector_store %arg5[%c0_16, %c0_17], %29 {strides = array<i32>} : memref<1x256xf32, #tpu.memory_space<vmem>>, vector<1x256xf32>,
    } else {
    }
    %c0 = arith.constant 0 : index
    %c0_1 = arith.constant 0 : index
    %c0_2 = arith.constant 0 : index
    %3 = vector.load %arg2[%c0, %c0_1, %c0_2] : memref<1x4x256xf32, #tpu.memory_space<vmem>>, vector<1x4x256xf32>
    %4 = vector.shape_cast %3 : vector<1x4x256xf32> to vector<4x256xf32>
    %c0_3 = arith.constant 0 : index
    %c0_4 = arith.constant 0 : index
    %c0_5 = arith.constant 0 : index
    %5 = vector.load %arg3[%c0_3, %c0_4, %c0_5] : memref<1x1x256xi32, #tpu.memory_space<vmem>>, vector<1x1x256xi32>
    %6 = vector.shape_cast %5 : vector<1x1x256xi32> to vector<1x256xi32>
    %7 = tpu.iota {dimensions = array<i32: 0>} : vector<4x256xi32>
    %8 = vector.broadcast %6 : vector<1x256xi32> to vector<4x256xi32>
    %9 = arith.cmpi eq, %7, %8 : vector<4x256xi32>
    %cst = arith.constant dense<0xFF800000> : vector<256xf32>
    %10 = vector.multi_reduction <maximumf>, %4, %cst [0] : vector<4x256xf32> to vector<256xf32>
    %11 = vector.shape_cast %10 : vector<256xf32> to vector<1x256xf32>
    %12 = vector.broadcast %11 : vector<1x256xf32> to vector<4x256xf32>
    %13 = arith.subf %4, %12 : vector<4x256xf32>
    %14 = math.exp %13 : vector<4x256xf32>
    %cst_6 = arith.constant 0.000000e+00 : f32
    %15 = vector.broadcast %cst_6 : f32 to vector<4x256xf32>
    %16 = arith.select %9, %14, %15 : vector<4x256xi1>, vector<4x256xf32>
    %cst_7 = arith.constant dense<0.000000e+00> : vector<256xf32>
    %17 = vector.multi_reduction <add>, %16, %cst_7 [0] : vector<4x256xf32> to vector<256xf32>
    %18 = vector.shape_cast %17 : vector<256xf32> to vector<1x256xf32>
    %cst_8 = arith.constant dense<0.000000e+00> : vector<256xf32>
    %19 = vector.multi_reduction <add>, %14, %cst_8 [0] : vector<4x256xf32> to vector<256xf32>
    %20 = vector.shape_cast %19 : vector<256xf32> to vector<1x256xf32>
    %21 = tpu.reciprocal %20 : vector<1x256xf32> -> vector<1x256xf32>
    %22 = arith.mulf %18, %21 : vector<1x256xf32>
    %c0_9 = arith.constant 0 : index
    %c0_10 = arith.constant 0 : index
    %23 = vector.load %arg5[%c0_9, %c0_10] : memref<1x256xf32, #tpu.memory_space<vmem>>, vector<1x256xf32>
    %24 = arith.addf %23, %22 : vector<1x256xf32>
    %c0_11 = arith.constant 0 : index
    %c0_12 = arith.constant 0 : index
    %25 = vector.load %arg5[%c0_11, %c0_12] : memref<1x256xf32, #tpu.memory_space<vmem>>, vector<1x256xf32>
    tpu.vector_store %arg5[%c0_11, %c0_12], %24 {strides = array<i32>} : memref<1x256xf32, #tpu.memory_space<vmem>>, vector<1x256xf32>,
    %c0_i32_13 = arith.constant 0 : i32
    %26 = arith.cmpi eq, %arg1, %c0_i32_13 : i32
    %27 = arith.extui %26 : i1 to i32
    %c0_i32_14 = arith.constant 0 : i32
    %28 = arith.cmpi ne, %27, %c0_i32_14 : i32
    scf.if %28 {
      %c0_15 = arith.constant 0 : index
      %c0_16 = arith.constant 0 : index
      %29 = vector.load %arg5[%c0_15, %c0_16] : memref<1x256xf32, #tpu.memory_space<vmem>>, vector<1x256xf32>
      %c0_17 = arith.constant 0 : index
      %c0_18 = arith.constant 0 : index
      %c0_19 = arith.constant 0 : index
      %30 = vector.load %arg4[%c0_17, %c0_18, %c0_19] : memref<1x1x256xf32, #tpu.memory_space<vmem>>, vector<1x1x256xf32>
      %31 = vector.shape_cast %30 : vector<1x1x256xf32> to vector<1x256xf32>
      %32 = vector.shape_cast %29 : vector<1x256xf32> to vector<1x1x256xf32>
      tpu.vector_store %arg4[%c0_17, %c0_18, %c0_19], %32 {strides = array<i32>} : memref<1x1x256xf32, #tpu.memory_space<vmem>>, vector<1x1x256xf32>,
    } else {
    }
    return
  }
  func.func @transform_0(%arg0: i32, %arg1: i32) -> (i32, i32, i32) {
    %c0_i32 = arith.constant 0 : i32
    %c0_i32_0 = arith.constant 0 : i32
    return %arg0, %c0_i32, %arg1 : i32, i32, i32
  }
  func.func @transform_1(%arg0: i32, %arg1: i32) -> (i32, i32, i32) {
    %c0_i32 = arith.constant 0 : i32
    %c0_i32_0 = arith.constant 0 : i32
    return %arg0, %c0_i32, %arg1 : i32, i32, i32
  }
  func.func @transform_2(%arg0: i32, %arg1: i32) -> (i32, i32, i32) {
    %c0_i32 = arith.constant 0 : i32
    %c0_i32_0 = arith.constant 0 : i32
    %c0_i32_1 = arith.constant 0 : i32
    return %arg0, %c0_i32, %c0_i32_0 : i32, i32, i32
  }
}

</mosaic_0001>

<llo_original>
// kernel: tpu_custom_call.1
$region0: #{tpu_custom_call.1}
  #allocation0 [shape = 'u32[]', space=smem, size = 0x4, offset = 0x4, fixed_abs, tag = 'smem constant byte address 0x4 - core index']
  #allocation1 [shape = 'u32[144,128]{1,0:T(1,128)}', space=vmem, size = 0x12000, scoped, tag = 'internal scratch']
  #allocation2 [shape = 'f32[1,256]{1,0:T(1,128)}', space=vmem, size = 0x400, scoped, tag = 'scratch operand']
  %s0 = inlined_call_operand.hbm [shape: f32[2,4,256], index: 0, kind: input, shape index: {}]
  %s1 = inlined_call_operand.hbm [shape: s32[2,1,256], index: 1, kind: input, shape index: {}]
  %s2 = inlined_call_operand.hbm [shape: f32[2,1,256], index: 2, kind: output, shape index: {}]
  %s3 = sld [smem:[#allocation0]]
  $region57: #{tpu_custom_call.1} parent=0
    _
  %s5 = ssub.s32 1, %s3
  %s6 = scalar_select 0, %s5, %s3
  $region1: #{tpu_custom_call.1} parent=0
    #allocation3 [shape = 'u8[8192]{0}', space=vmem, size = 0x2000, scoped, tag = 'input window, operand 0']
    #allocation4 [shape = 's32[2]{0}', space=sflag, size = 0x8, scoped, tag = 'scoped memory for tpu_custom_call.1']
    #allocation5 [shape = 's32[2]{0}', space=sflag, size = 0x8, scoped, tag = 'scoped memory for tpu_custom_call.1']
    #allocation6 [shape = 'u8[2048]{0}', space=vmem, size = 0x800, scoped, tag = 'input window, operand 1']
    #allocation7 [shape = 's32[2]{0}', space=sflag, size = 0x8, scoped, tag = 'scoped memory for tpu_custom_call.1']
    #allocation8 [shape = 'u8[2048]{0}', space=vmem, size = 0x800, scoped, tag = 'output window, operand 0']
    %7 = vsyncpa [#allocation4], 0
    %s8 = scalar_lea.sflag [#allocation4], 1
    %9 = vsyncpa %s8, 0
    %10 = vsyncpa [#allocation7], 0
    %s11 = scalar_lea.sflag [#allocation7], 1
    %12 = vsyncpa %s11, 0
    %13 = vsyncpa [#allocation5], 0
    %s14 = scalar_lea.sflag [#allocation5], 1
    %15 = vsyncpa %s14, 0
    loop: start=0, step=1, limit=4
    $region2: #{tpu_custom_call.1} parent=1 // loop_pre_header
      _
    $region3: #{tpu_custom_call.1} parent=1 // loop_header
      %s17 = sphi 0, %s21
      %p18 = scmp.ge.s32.totalorder %s17, 4
      %s24 = sphi 0, %s36
      %s25 = sphi 0, %s32
      %s26 = sphi 0, %s24
      %s27 = sphi 0, %s25
      %s28 = sphi 0, %s26
      %s29 = sphi 0, %s27
      %s41 = sphi 0, %s43
      %s44 = sphi 0, %s41
      %s45 = sphi 0, %s44
      %s61 = sphi 0, %s45
      %s69 = sphi 0, %s71
      %s72 = sphi 0, %s69
      %s73 = sphi 0, %s72
      %s89 = sphi 0, %s73
      %s95 = sphi 0, %s97
      %s98 = sphi 0, %s95
      %s99 = sphi 0, %s98
      %s115 = sphi 0, %s99
    $region4: #{tpu_custom_call.1} parent=1 // loop_header_branch
      %20 = sbr.rel (%p18) target = $region8
    $region5: #{tpu_custom_call.1} parent=1 // loop_body
      %s22 = ssub.s32 %s17, 1
      %s23 = ssub.s32 %s17, 2
      %s30 = sadd.s32 1, %s25
      %p31 = scmp.ge.s32.totalorder %s30, 1
      %s32 = scalar_select %p31, 0, %s30
      %s33 = sadd.s32 1, %s24
      %s34 = scalar_select %p31, %s33, %s24
      %p35 = scmp.ge.s32.totalorder %s34, 2
      %s36 = scalar_select %p35, 0, %s34
      %s37 = ssub.s32 %s24, %s36
      %s38 = ssub.s32 %s25, %s32
      %s39 = sor.u32 %s37, %s38
      %p40 = scmp.eq.s32.totalorder %s39, 0
      %s42 = sadd.s32 %s41, 1
      %s43 = scalar_select %p40, %s41, %s42
      %p46 = pneg %p40
      %p47 = scmp.eq.s32.totalorder %s17, 1
      %p48 = por %p46, %p47
      %p49 = scmp.ne.s32.totalorder %s41, %s44
      %p50 = scmp.eq.s32.totalorder %s17, 0
      %p51 = por %p49, %p50
      %p52 = scmp.ne.s32.totalorder %s41, %s44
      %p53 = scmp.eq.s32.totalorder %s22, 1
      %p54 = por %p52, %p53
      %p55 = scmp.ne.s32.totalorder %s44, %s45
      %p56 = scmp.eq.s32.totalorder %s22, 0
      %p57 = por %p55, %p56
      %p58 = scmp.ne.s32.totalorder %s44, %s45
      %p59 = scmp.eq.s32.totalorder %s23, 1
      %p60 = por %p58, %p59
      %p62 = scmp.ne.s32.totalorder %s45, %s61
      %p63 = scmp.eq.s32.totalorder %s23, 0
      %p64 = por %p62, %p63
      %s65 = ssub.s32 %s24, %s36
      %s66 = ssub.s32 %s25, %s32
      %s67 = sor.u32 %s65, %s66
      %p68 = scmp.eq.s32.totalorder %s67, 0
      %s70 = sadd.s32 %s69, 1
      %s71 = scalar_select %p68, %s69, %s70
      %p74 = pneg %p68
      %p75 = scmp.eq.s32.totalorder %s17, 1
      %p76 = por %p74, %p75
      %p77 = scmp.ne.s32.totalorder %s69, %s72
      %p78 = scmp.eq.s32.totalorder %s17, 0
      %p79 = por %p77, %p78
      %p80 = scmp.ne.s32.totalorder %s69, %s72
      %p81 = scmp.eq.s32.totalorder %s22, 1
      %p82 = por %p80, %p81
      %p83 = scmp.ne.s32.totalorder %s72, %s73
      %p84 = scmp.eq.s32.totalorder %s22, 0
      %p85 = por %p83, %p84
      %p86 = scmp.ne.s32.totalorder %s72, %s73
      %p87 = scmp.eq.s32.totalorder %s23, 1
      %p88 = por %p86, %p87
      %p90 = scmp.ne.s32.totalorder %s73, %s89
      %p91 = scmp.eq.s32.totalorder %s23, 0
      %p92 = por %p90, %p91
      %s93 = ssub.s32 %s24, %s36
      %p94 = scmp.eq.s32.totalorder %s93, 0
      %s96 = sadd.s32 %s95, 1
      %s97 = scalar_select %p94, %s95, %s96
      %p100 = pneg %p94
      %p101 = scmp.eq.s32.totalorder %s17, 1
      %p102 = por %p100, %p101
      %p103 = scmp.ne.s32.totalorder %s95, %s98
      %p104 = scmp.eq.s32.totalorder %s17, 0
      %p105 = por %p103, %p104
      %p106 = scmp.ne.s32.totalorder %s95, %s98
      %p107 = scmp.eq.s32.totalorder %s22, 1
      %p108 = por %p106, %p107
      %p109 = scmp.ne.s32.totalorder %s98, %s99
      %p110 = scmp.eq.s32.totalorder %s22, 0
      %p111 = por %p109, %p110
      %p112 = scmp.ne.s32.totalorder %s98, %s99
      %p113 = scmp.eq.s32.totalorder %s23, 1
      %p114 = por %p112, %p113
      %p116 = scmp.ne.s32.totalorder %s99, %s115
      %p117 = scmp.eq.s32.totalorder %s23, 0
      %p118 = por %p116, %p117
      %p119 = scmp.le.s32.totalorder 1, %s17
      %p120 = scmp.lt.s32.totalorder %s17, 3
      %p121 = pnand %p119, %p120
      %p122 = pneg %p121
      // Predicated region
      $region9: #{tpu_custom_call.1} parent=5 // pred_check
        _
      $region10: #{tpu_custom_call.1} parent=5 // pred_check_branch
        %124 = sbr.rel (%p121) target = $region12
      $region11: #{tpu_custom_call.1} parent=5 // pred_region
        %s125 = ssub.s32 %s17, 1
      $region12: #{tpu_custom_call.1} parent=5 // pred_fallthru
        _
      %p126 = scmp.lt.s32.totalorder %s17, 2
      // Predicated region
      $region13: #{tpu_custom_call.1} parent=5 // pred_check
        %p127 = pneg %p126
      $region14: #{tpu_custom_call.1} parent=5 // pred_check_branch
        %129 = sbr.rel (%p127) target = $region16
      $region15: #{tpu_custom_call.1} parent=5 // pred_region
        // Predicated region
        $region17: #{tpu_custom_call.1} parent=15 // pred_check
          %p130 = pneg %p51
        $region18: #{tpu_custom_call.1} parent=15 // pred_check_branch
          %132 = sbr.rel (%p130) target = $region20
        $region19: #{tpu_custom_call.1} parent=15 // pred_region
          %s133 = sand.u32 %s41, 1
          %s134 = scalar_lea.sflag [#allocation4], %s133
          %s135 = sand.u32 %s41, 1
          %s136 = smul.addr %s135, 8
          %s137 = scalar_lea.vmem [#allocation3], %s136
          %s138 = smul.u32 2, %s25
          %s140 = ssub.s32 128, 128
          %141 = vsyncadd %s134, %s140
          %s142 = smul.addr %s24, 2
          %s143 = sadd.s32 %s138, %s142
          %s144 = smul.addr %s143, 64
          %s145 = scalar_lea.hbm %s0, %s144
          %s147 = sshll.u32 %s137, 4
          %s148 = int_to_ptr.vmem [resolvable:$true] %s147
          %150 = dma.hbm_to_vmem [thread:$0]  %s145, 128, %s148, %s134
        $region20: #{tpu_custom_call.1} parent=15 // pred_fallthru
          _
        // Predicated region
        $region21: #{tpu_custom_call.1} parent=15 // pred_check
          %p151 = pneg %p79
        $region22: #{tpu_custom_call.1} parent=15 // pred_check_branch
          %153 = sbr.rel (%p151) target = $region24
        $region23: #{tpu_custom_call.1} parent=15 // pred_region
          %s154 = sand.u32 %s69, 1
          %s155 = scalar_lea.sflag [#allocation7], %s154
          %s156 = sand.u32 %s69, 1
          %s157 = smul.addr %s156, 2
          %s158 = scalar_lea.vmem [#allocation6], %s157
          %s159 = smul.u32 2, %s25
          %s161 = ssub.s32 32, 32
          %162 = vsyncadd %s155, %s161
          %s163 = smul.addr %s24, 2
          %s164 = sadd.s32 %s159, %s163
          %s165 = smul.addr %s164, 16
          %s166 = scalar_lea.hbm %s1, %s165
          %s168 = sshll.u32 %s158, 4
          %s169 = int_to_ptr.vmem [resolvable:$true] %s168
          %171 = dma.hbm_to_vmem [thread:$0]  %s166, 32, %s169, %s155
        $region24: #{tpu_custom_call.1} parent=15 // pred_fallthru
          _
      $region16: #{tpu_custom_call.1} parent=5 // pred_fallthru
        _
      %p172 = scmp.le.s32.totalorder 1, %s17
      %p173 = scmp.lt.s32.totalorder %s17, 3
      %p174 = pnand %p172, %p173
      %p175 = pneg %p174
      // Predicated region
      $region25: #{tpu_custom_call.1} parent=5 // pred_check
        _
      $region26: #{tpu_custom_call.1} parent=5 // pred_check_branch
        %177 = sbr.rel (%p174) target = $region28
      $region27: #{tpu_custom_call.1} parent=5 // pred_region
        %s178 = ssub.s32 %s17, 1
        %s179 = sand.u32 %s44, 1
        %s180 = scalar_lea.sflag [#allocation4], %s179
        %s181 = sand.u32 %s44, 1
        %s182 = smul.addr %s181, 8
        %s183 = scalar_lea.vmem [#allocation3], %s182
        // Predicated region
        $region29: #{tpu_custom_call.1} parent=27 // pred_check
          %p184 = pneg %p57
        $region30: #{tpu_custom_call.1} parent=27 // pred_check_branch
          %186 = sbr.rel (%p184) target = $region32
        $region31: #{tpu_custom_call.1} parent=27 // pred_region
          %187 = dma.done %s180, 128
        $region32: #{tpu_custom_call.1} parent=27 // pred_fallthru
          _
        %s188 = sand.u32 %s72, 1
        %s189 = scalar_lea.sflag [#allocation7], %s188
        %s190 = sand.u32 %s72, 1
        %s191 = smul.addr %s190, 2
        %s192 = scalar_lea.vmem [#allocation6], %s191
        // Predicated region
        $region33: #{tpu_custom_call.1} parent=27 // pred_check
          %p193 = pneg %p85
        $region34: #{tpu_custom_call.1} parent=27 // pred_check_branch
          %195 = sbr.rel (%p193) target = $region36
        $region35: #{tpu_custom_call.1} parent=27 // pred_region
          %196 = dma.done %s189, 32
        $region36: #{tpu_custom_call.1} parent=27 // pred_fallthru
          _
        %s197 = sand.u32 %s44, 1
        %s198 = scalar_lea.sflag [#allocation4], %s197
        %s199 = sand.u32 %s44, 1
        %s200 = smul.addr %s199, 8
        %s201 = scalar_lea.vmem [#allocation3], %s200
        %p202 = pneg %p57
        %p203 = pneg %p54
        %s204 = sand.u32 %s72, 1
        %s205 = scalar_lea.sflag [#allocation7], %s204
        %s206 = sand.u32 %s72, 1
        %s207 = smul.addr %s206, 2
        %s208 = scalar_lea.vmem [#allocation6], %s207
        %p209 = pneg %p85
        %p210 = pneg %p82
        %p211 = pneg %p111
        %p212 = pneg %p108
        %s213 = sand.u32 %s98, 1
        %s214 = scalar_lea.sflag [#allocation5], %s213
        %s215 = sand.u32 %s98, 1
        %s216 = smul.addr %s215, 2
        %s217 = scalar_lea.vmem [#allocation8], %s216
        %s218 = smul.u32 2, %s27
        %s219 = smul.u32 2, %s27
        %p220 = scmp.eq.s32.totalorder %s27, 0
        // Predicated region
        $region37: #{tpu_custom_call.1} parent=27 // pred_check
          %p221 = pneg %p220
        $region38: #{tpu_custom_call.1} parent=27 // pred_check_branch
          %223 = sbr.rel (%p221) target = $region40
        $region39: #{tpu_custom_call.1} parent=27 // pred_region
          %v224 = vlaneseq
          %vm225 = vcmp.ge.s32.totalorder %v224, 0
          %vm226 = vcmp.lt.s32.totalorder %v224, 256
          %vm227 = vmand %vm225, %vm226
          %228 = vst.msk [vmem:[#allocation2] sm:$0x3] %vm227, 0.0
        $region40: #{tpu_custom_call.1} parent=27 // pred_fallthru
          _
        %v229 = vld [vmem:[%s183] sm:$0xff]
        %v230 = vld [vmem:[%s192] sm:$0x3]
        %v231 = vlaneseq
        %v232 = vshrl.u32 %v231, 7
        %v233 = vlaneseq
        %v234 = vshrl.u32 %v233, 7
        %v235 = vsub.s32 0, %v234
        %v236 = vrot.slane %v230, %v235
        %v237 = vlaneseq
        %v238 = vshrl.u32 %v237, 7
        %v239 = vsub.s32 1, %v238
        %v240 = vrot.slane %v230, %v239
        %vm241 = vcmp.eq.s32.totalorder %v232, %v236
        %vm242 = vcmp.eq.s32.totalorder %v232, %v240
        %v244 = vcombine.high %v229, %v229
        %vm246 = vcmask 1043456
        %v247 = vsel %vm246, %v229, -inf
        %v248 = vrot.slane %v247, 4
        %v249 = vmax.f32 %v247, %v248
        %v250 = vrot.slane %v249, 2
        %v251 = vmax.f32 %v249, %v250
        %v252 = vrot.slane %v251, 1
        %v253 = vmax.f32 %v251, %v252
        %v254 = vsel %vm246, %v244, -inf
        %v255 = vrot.slane %v254, 4
        %v256 = vmax.f32 %v254, %v255
        %v257 = vrot.slane %v256, 2
        %v258 = vmax.f32 %v256, %v257
        %v259 = vrot.slane %v258, 1
        %v260 = vmax.f32 %v258, %v259
        %v263 = vcombine.low %v253, %v260
        %v265 = vsub.f32 %v229, %v263
        %v266 = vmul.f32 %v265, 1.442695
        %v267 = vpow.pop %v266
        %v269 = vcombine.high %v267, %v267
        %v271 = vsel %vm241, %v267, 0.0
        %v272 = vsel %vm242, %v269, 0.0
        %v273 = vsel %vm246, %v271, 0.0
        %v274 = vrot.slane %v273, 4
        %v275 = vadd.f32 %v273, %v274
        %v276 = vrot.slane %v275, 2
        %v277 = vadd.f32 %v275, %v276
        %v278 = vrot.slane %v277, 1
        %v279 = vadd.f32 %v277, %v278
        %v280 = vsel %vm246, %v272, 0.0
        %v281 = vrot.slane %v280, 4
        %v282 = vadd.f32 %v280, %v281
        %v283 = vrot.slane %v282, 2
        %v284 = vadd.f32 %v282, %v283
        %v285 = vrot.slane %v284, 1
        %v286 = vadd.f32 %v284, %v285
        %v287 = vsel %vm246, %v267, 0.0
        %v288 = vrot.slane %v287, 4
        %v289 = vadd.f32 %v287, %v288
        %v290 = vrot.slane %v289, 2
        %v291 = vadd.f32 %v289, %v290
        %v292 = vrot.slane %v291, 1
        %v293 = vadd.f32 %v291, %v292
        %v294 = vsel %vm246, %v269, 0.0
        %v295 = vrot.slane %v294, 4
        %v296 = vadd.f32 %v294, %v295
        %v297 = vrot.slane %v296, 2
        %v298 = vadd.f32 %v296, %v297
        %v299 = vrot.slane %v298, 1
        %v300 = vadd.f32 %v298, %v299
        %v301 = vrcp.pop %v293
        %v302 = vrcp.pop %v300
        %v303 = vmul.f32 %v279, %v301
        %v304 = vmul.f32 %v286, %v302
        %v305 = vld [vmem:[#allocation2] sm:$0x3]
        %v308 = vcombine.low %v303, %v304
        %v310 = vunpack.c.l.s4 1966171168
        %v311 = vunpack.c.0.s8 %v310
        %v312 = vlaneseq
        %v313 = vshrl.u32 %v312, 7
        %v314 = vsub.s32 %v311, %v313
        %v315 = vrot.slane %v308, %v314
        %v317 = vunpack.c.l.s4 1966171168
        %v318 = vunpack.c.0.s8 %v317
        %v319 = vlaneseq
        %v320 = vshrl.u32 %v319, 7
        %v321 = vsub.s32 %v318, %v320
        %v322 = vrot.slane %v315, %v321
        %v324 = vadd.f32 %v305, %v322
        %v325 = vlaneseq
        %vm326 = vcmp.ge.s32.totalorder %v325, 0
        %vm327 = vcmp.lt.s32.totalorder %v325, 256
        %vm328 = vmand %vm326, %vm327
        %329 = vst.msk [vmem:[#allocation2] sm:$0x3] %vm328, %v324
        // Predicated region
        $region41: #{tpu_custom_call.1} parent=27 // pred_check
          %p330 = pneg %p220
        $region42: #{tpu_custom_call.1} parent=27 // pred_check_branch
          %332 = sbr.rel (%p330) target = $region44
        $region43: #{tpu_custom_call.1} parent=27 // pred_region
          %v333 = vld [vmem:[#allocation2] sm:$0x3]
          %334 = vst.msk [vmem:[%s217] sm:$0x3] %vm328, %v333
        $region44: #{tpu_custom_call.1} parent=27 // pred_fallthru
          _
        %s335 = sand.u32 %s98, 1
        %s336 = scalar_lea.sflag [#allocation5], %s335
        %s337 = sand.u32 %s98, 1
        %s338 = smul.addr %s337, 2
        %s339 = scalar_lea.vmem [#allocation8], %s338
        // Predicated region
        $region45: #{tpu_custom_call.1} parent=27 // pred_check
          %p340 = pneg %p108
        $region46: #{tpu_custom_call.1} parent=27 // pred_check_branch
          %342 = sbr.rel (%p340) target = $region48
        $region47: #{tpu_custom_call.1} parent=27 // pred_region
          %s344 = ssub.s32 32, 32
          %345 = vsyncadd %s336, %s344
          %s346 = smul.addr %s26, 2
          %s347 = smul.addr %s346, 16
          %s348 = scalar_lea.hbm %s2, %s347
          %s350 = sshll.u32 %s339, 4
          %s351 = int_to_ptr.vmem [resolvable:$true] %s350
          %353 = dma.vmem_to_hbm [thread:$0]  %s351, 32, %s348, %s336
        $region48: #{tpu_custom_call.1} parent=27 // pred_fallthru
          _
      $region28: #{tpu_custom_call.1} parent=5 // pred_fallthru
        _
      %p354 = scmp.le.s32.totalorder 2, %s17
      // Predicated region
      $region49: #{tpu_custom_call.1} parent=5 // pred_check
        %p355 = pneg %p354
      $region50: #{tpu_custom_call.1} parent=5 // pred_check_branch
        %357 = sbr.rel (%p355) target = $region52
      $region51: #{tpu_custom_call.1} parent=5 // pred_region
        %s358 = ssub.s32 %s17, 2
        // Predicated region
        $region53: #{tpu_custom_call.1} parent=51 // pred_check
          %p359 = pneg %p114
        $region54: #{tpu_custom_call.1} parent=51 // pred_check_branch
          %361 = sbr.rel (%p359) target = $region56
        $region55: #{tpu_custom_call.1} parent=51 // pred_region
          %s362 = sand.u32 %s99, 1
          %s363 = scalar_lea.sflag [#allocation5], %s362
          %s364 = sand.u32 %s99, 1
          %s365 = smul.addr %s364, 2
          %s366 = scalar_lea.vmem [#allocation8], %s365
          %367 = dma.done %s363, 32
        $region56: #{tpu_custom_call.1} parent=51 // pred_fallthru
          _
      $region52: #{tpu_custom_call.1} parent=5 // pred_fallthru
        _
    $region6: #{tpu_custom_call.1} parent=1 // loop_footer
      %s21 = sadd.s32 1, %s17
    $region7: #{tpu_custom_call.1} parent=1 // loop_footer_branch
      %16 = sbr.rel target = $region3
    $region8: #{tpu_custom_call.1} parent=1 // loop_exit
      _
    %368 = vsyncpa [#allocation4], 1
    %s369 = scalar_lea.sflag [#allocation4], 1
    %370 = vsyncpa %s369, 1
    %371 = vsyncpa [#allocation7], 1
    %s372 = scalar_lea.sflag [#allocation7], 1
    %373 = vsyncpa %s372, 1
    %374 = vsyncpa [#allocation5], 1
    %s375 = scalar_lea.sflag [#allocation5], 1
    %376 = vsyncpa %s375, 1

</llo_original>
